<compile_context>
chip_gen: v5e
topology: v5e:2x2
jax: 0.10.0
libtpu: 0.0.40
codegen_flags: <defaults>
</compile_context>

<pallas_src>
import jax
import jax.numpy as jnp
from jax.experimental import pallas as pl
from jax.experimental.pallas import tpu as pltpu

Z_DIM = 32          # z_dimension
HID = 1024          # hid_channels
N_BARS = 2          # n_bars (kernel assumes the module default n_bars == 2)
BN_EPS = 1e-5


def temporal_kernel(x_ref, w1_ref, g1_ref, be1_ref, w2_ref, g2_ref, be2_ref, out_ref):
    # x: (B, Z) f32; w1: (Z, 2H) bf16; g1/be1: (1, H) f32
    # w2: (H, Z) bf16; g2/be2: (1, Z) f32; out: (2B, Z) f32
    b = x_ref.shape[0]
    n = jnp.float32(N_BARS * b)          # BN population: B * 2(spatial h) * 1(spatial w)

    # --- ConvTranspose2d(Z, H, k=(2,1)) on a 1x1 input: ONE fused MXU matmul ---
    x = x_ref[...].astype(jnp.bfloat16)
    hcat = jnp.dot(x, w1_ref[...], preferred_element_type=jnp.float32)   # (B, 2H) f32

    # --- BatchNorm2d(H), training-mode stats over (T, B), one-pass variance ---
    s = jnp.sum(hcat, axis=0, keepdims=True)                             # (1, 2H)
    sq = jnp.sum(hcat * hcat, axis=0, keepdims=True)                     # (1, 2H)
    mean1 = (s[:, :HID] + s[:, HID:]) / n                                # (1, H)
    ex2_1 = (sq[:, :HID] + sq[:, HID:]) / n
    var1 = ex2_1 - mean1 * mean1
    inv1 = jax.lax.rsqrt(var1 + BN_EPS) * g1_ref[...]
    shift1 = be1_ref[...] - mean1 * inv1

    # normalize + ReLU each time-step half, stack along M for the next matmul
    h0 = jnp.maximum(hcat[:, :HID] * inv1 + shift1, 0.0)                 # (B, H)
    h1 = jnp.maximum(hcat[:, HID:] * inv1 + shift1, 0.0)                 # (B, H)
    h_all = jnp.concatenate([h0, h1], axis=0)                            # (2B, H)

    # --- ConvTranspose2d(H, Z, k=(1,1)): ONE fused (2B,H)@(H,Z) MXU matmul ---
    y = jnp.dot(h_all.astype(jnp.bfloat16), w2_ref[...],
                preferred_element_type=jnp.float32)                      # (2B, Z) f32

    # --- BatchNorm2d(Z) + ReLU (one-pass stats over all 2B rows) ---
    mean2 = jnp.sum(y, axis=0, keepdims=True) / n                        # (1, Z)
    ex2_2 = jnp.sum(y * y, axis=0, keepdims=True) / n
    var2 = ex2_2 - mean2 * mean2
    inv2 = jax.lax.rsqrt(var2 + BN_EPS) * g2_ref[...]
    shift2 = be2_ref[...] - mean2 * inv2

    out_ref[...] = jnp.maximum(y * inv2 + shift2, 0.0)                   # (2B, Z)


def temporal_network(x, params):
    """x: (B, Z_DIM) -> (B, Z_DIM, N_BARS), matching the PyTorch module output."""
    w1, b1, g1, be1, w2, b2, g2, be2 = params
    del b1, b2  # exactly cancelled by the training-mode BatchNorms that follow
    B = x.shape[0]

    # Weight prep (fused into the same jit as the pallas_call):
    #   (2, Z, H) -> (Z, 2H) concat along N; cast weights to bf16 to halve the
    #   HBM->VMEM streaming bytes (the dominant cost at these shapes).
    w1_cat = jnp.concatenate([w1[0], w1[1]], axis=1).astype(jnp.bfloat16)  # (Z, 2H)
    w2_b = w2.astype(jnp.bfloat16)                                         # (H, Z)

    vmem = pl.BlockSpec(memory_space=pltpu.MemorySpace.VMEM)
    y = pl.pallas_call(
        temporal_kernel,
        out_shape=jax.ShapeDtypeStruct((N_BARS * B, Z_DIM), jnp.float32),
        in_specs=[vmem] * 7,
        out_specs=vmem,
    )(x, w1_cat, g1, be1, w2_b, g2, be2)

    # (T*B, Z) -> (T, B, Z) -> (B, Z, T); tiny, stays fused under jit.
    return jnp.transpose(y.reshape(N_BARS, B, Z_DIM), (1, 2, 0))


def init_params(key):
    k1, k2, k3, k4 = jax.random.split(key, 4)
    # ConvTranspose2d(Z, H, k=(2,1)) weight is (Z, H, 2, 1); store as (2, Z, H).
    w1 = (jax.random.normal(k1, (Z_DIM, HID, 2), jnp.float32) * 0.05).transpose(2, 0, 1)
    b1 = (jax.random.normal(k2, (HID,), jnp.float32) * 0.05).reshape(1, HID)
    g1 = jnp.ones((1, HID), jnp.float32)     # BatchNorm gamma init
    be1 = jnp.zeros((1, HID), jnp.float32)   # BatchNorm beta init
    # ConvTranspose2d(H, Z, k=(1,1)) weight is (H, Z, 1, 1); store as (H, Z).
    w2 = jax.random.normal(k3, (HID, Z_DIM), jnp.float32) * 0.05
    b2 = (jax.random.normal(k4, (Z_DIM,), jnp.float32) * 0.05).reshape(1, Z_DIM)
    g2 = jnp.ones((1, Z_DIM), jnp.float32)
    be2 = jnp.zeros((1, Z_DIM), jnp.float32)
    return w1, b1, g1, be1, w2, b2, g2, be2


def reference(x, params):
    """Pure-JAX reference of the same forward pass.

    Uses the same bf16 matmul-input precision as the kernel (f32 accumulation,
    f32 BN/ReLU epilogue) and KEEPS the conv biases b1/b2 — demonstrating that
    dropping them inside the kernel is a mathematical no-op under training-mode
    BatchNorm (differences are at fp-rounding-order level).
    """
    w1, b1, g1, be1, w2, b2, g2, be2 = params
    xb = x.astype(jnp.bfloat16)
    w1b = w1.astype(jnp.bfloat16)
    w2b = w2.astype(jnp.bfloat16)
    h = jnp.stack(
        [jnp.dot(xb, w1b[0], preferred_element_type=jnp.float32) + b1,
         jnp.dot(xb, w1b[1], preferred_element_type=jnp.float32) + b1], axis=0)  # (T,B,H)
    m = h.mean(axis=(0, 1), keepdims=True)
    v = ((h - m) ** 2).mean(axis=(0, 1), keepdims=True)
    h = jnp.maximum((h - m) / jnp.sqrt(v + BN_EPS) * g1 + be1, 0.0)
    y = jnp.einsum("tbh,hz->tbz", h.astype(jnp.bfloat16), w2b,
                   preferred_element_type=jnp.float32) + b2                      # (T,B,Z)
    m2 = y.mean(axis=(0, 1), keepdims=True)
    v2 = ((y - m2) ** 2).mean(axis=(0, 1), keepdims=True)
    y = jnp.maximum((y - m2) / jnp.sqrt(v2 + BN_EPS) * g2 + be2, 0.0)
    return jnp.transpose(y, (1, 2, 0))                                           # (B, Z, T)


if __name__ == "__main__":
    key = jax.random.PRNGKey(0)
    kx, kp = jax.random.split(key)
    B = 4
    x = jax.random.normal(kx, (B, Z_DIM), jnp.float32)
    params = init_params(kp)

    fwd = jax.jit(temporal_network)
    out = jax.block_until_ready(fwd(x, params))
    ref = reference(x, params)

    assert out.shape == (B, Z_DIM, N_BARS), out.shape
    # Tolerance covers the intentional fp-ordering changes (bias-drop, one-pass
    # variance, fused reductions); observed max abs diff is ~1e-6.
    assert jnp.allclose(out, ref, atol=1e-3, rtol=1e-3), float(jnp.max(jnp.abs(out - ref)))
    print("KERNEL_OK")
</pallas_src>

<mosaic_0001>
module attributes {stable_mosaic.version = 11 : i64} {
  func.func @temporal_kernel(%arg0: memref<4x32xf32, #tpu.memory_space<vmem>>, %arg1: memref<32x2048xbf16, #tpu.memory_space<vmem>>, %arg2: memref<1x1024xf32, #tpu.memory_space<vmem>>, %arg3: memref<1x1024xf32, #tpu.memory_space<vmem>>, %arg4: memref<1024x32xbf16, #tpu.memory_space<vmem>>, %arg5: memref<1x32xf32, #tpu.memory_space<vmem>>, %arg6: memref<1x32xf32, #tpu.memory_space<vmem>>, %arg7: memref<8x32xf32, #tpu.memory_space<vmem>>) attributes {dimension_semantics = [], scalar_prefetch = 0 : i64, scratch_operands = 0 : i64, tpu.core_type = #tpu.core_type<tc>} {
    %c0 = arith.constant 0 : index
    %c0_0 = arith.constant 0 : index
    %0 = vector.load %arg0[%c0, %c0_0] : memref<4x32xf32, #tpu.memory_space<vmem>>, vector<4x32xf32>
    %1 = arith.truncf %0 : vector<4x32xf32> to vector<4x32xbf16>
    %c0_1 = arith.constant 0 : index
    %c0_2 = arith.constant 0 : index
    %2 = vector.load %arg1[%c0_1, %c0_2] : memref<32x2048xbf16, #tpu.memory_space<vmem>>, vector<32x2048xbf16>
    %cst = arith.constant dense<0.000000e+00> : vector<4x2048xf32>
    %3 = tpu.matmul %1, %2, %cst {dimension_numbers = #tpu.dot_dimension_numbers<[1], [0], [0], [1], [0, 0, 1, 1], [], []>} : vector<4x32xbf16>, vector<32x2048xbf16>, vector<4x2048xf32> -> vector<4x2048xf32>
    %cst_3 = arith.constant dense<0.000000e+00> : vector<2048xf32>
    %4 = vector.multi_reduction <add>, %3, %cst_3 [0] : vector<4x2048xf32> to vector<2048xf32>
    %5 = vector.shape_cast %4 : vector<2048xf32> to vector<1x2048xf32>
    %6 = arith.mulf %3, %3 : vector<4x2048xf32>
    %cst_4 = arith.constant dense<0.000000e+00> : vector<2048xf32>
    %7 = vector.multi_reduction <add>, %6, %cst_4 [0] : vector<4x2048xf32> to vector<2048xf32>
    %8 = vector.shape_cast %7 : vector<2048xf32> to vector<1x2048xf32>
    %9 = vector.extract_strided_slice %5 {offsets = [0, 0], sizes = [1, 1024], strides = [1, 1]} : vector<1x2048xf32> to vector<1x1024xf32>
    %10 = vector.extract_strided_slice %5 {offsets = [0, 1024], sizes = [1, 1024], strides = [1, 1]} : vector<1x2048xf32> to vector<1x1024xf32>
    %11 = arith.addf %9, %10 : vector<1x1024xf32>
    %cst_5 = arith.constant 8.000000e+00 : f32
    %12 = vector.broadcast %cst_5 : f32 to vector<1x1024xf32>
    %13 = arith.divf %11, %12 : vector<1x1024xf32>
    %14 = vector.extract_strided_slice %8 {offsets = [0, 0], sizes = [1, 1024], strides = [1, 1]} : vector<1x2048xf32> to vector<1x1024xf32>
    %15 = vector.extract_strided_slice %8 {offsets = [0, 1024], sizes = [1, 1024], strides = [1, 1]} : vector<1x2048xf32> to vector<1x1024xf32>
    %16 = arith.addf %14, %15 : vector<1x1024xf32>
    %cst_6 = arith.constant 8.000000e+00 : f32
    %17 = vector.broadcast %cst_6 : f32 to vector<1x1024xf32>
    %18 = arith.divf %16, %17 : vector<1x1024xf32>
    %19 = arith.mulf %13, %13 : vector<1x1024xf32>
    %20 = arith.subf %18, %19 : vector<1x1024xf32>
    %cst_7 = arith.constant 9.99999974E-6 : f32
    %21 = vector.broadcast %cst_7 : f32 to vector<1x1024xf32>
    %22 = arith.addf %20, %21 : vector<1x1024xf32>
    %23 = math.rsqrt %22 : vector<1x1024xf32>
    %c0_8 = arith.constant 0 : index
    %c0_9 = arith.constant 0 : index
    %24 = vector.load %arg2[%c0_8, %c0_9] : memref<1x1024xf32, #tpu.memory_space<vmem>>, vector<1x1024xf32>
    %25 = arith.mulf %23, %24 : vector<1x1024xf32>
    %c0_10 = arith.constant 0 : index
    %c0_11 = arith.constant 0 : index
    %26 = vector.load %arg3[%c0_10, %c0_11] : memref<1x1024xf32, #tpu.memory_space<vmem>>, vector<1x1024xf32>
    %27 = arith.mulf %13, %25 : vector<1x1024xf32>
    %28 = arith.subf %26, %27 : vector<1x1024xf32>
    %29 = vector.extract_strided_slice %3 {offsets = [0, 0], sizes = [4, 1024], strides = [1, 1]} : vector<4x2048xf32> to vector<4x1024xf32>
    %30 = vector.broadcast %25 : vector<1x1024xf32> to vector<4x1024xf32>
    %31 = arith.mulf %29, %30 : vector<4x1024xf32>
    %32 = vector.broadcast %28 : vector<1x1024xf32> to vector<4x1024xf32>
    %33 = arith.addf %31, %32 : vector<4x1024xf32>
    %cst_12 = arith.constant 0.000000e+00 : f32
    %34 = vector.broadcast %cst_12 : f32 to vector<4x1024xf32>
    %35 = arith.maximumf %33, %34 : vector<4x1024xf32>
    %36 = vector.extract_strided_slice %3 {offsets = [0, 1024], sizes = [4, 1024], strides = [1, 1]} : vector<4x2048xf32> to vector<4x1024xf32>
    %37 = vector.broadcast %25 : vector<1x1024xf32> to vector<4x1024xf32>
    %38 = arith.mulf %36, %37 : vector<4x1024xf32>
    %39 = vector.broadcast %28 : vector<1x1024xf32> to vector<4x1024xf32>
    %40 = arith.addf %38, %39 : vector<4x1024xf32>
    %cst_13 = arith.constant 0.000000e+00 : f32
    %41 = vector.broadcast %cst_13 : f32 to vector<4x1024xf32>
    %42 = arith.maximumf %40, %41 : vector<4x1024xf32>
    %43 = tpu.concatenate %35, %42 in 0 : vector<4x1024xf32>, vector<4x1024xf32> -> vector<8x1024xf32>
    %44 = arith.truncf %43 : vector<8x1024xf32> to vector<8x1024xbf16>
    %c0_14 = arith.constant 0 : index
    %c0_15 = arith.constant 0 : index
    %45 = vector.load %arg4[%c0_14, %c0_15] : memref<1024x32xbf16, #tpu.memory_space<vmem>>, vector<1024x32xbf16>
    %cst_16 = arith.constant dense<0.000000e+00> : vector<8x32xf32>
    %46 = tpu.matmul %44, %45, %cst_16 {dimension_numbers = #tpu.dot_dimension_numbers<[1], [0], [0], [1], [0, 0, 1, 1], [], []>} : vector<8x1024xbf16>, vector<1024x32xbf16>, vector<8x32xf32> -> vector<8x32xf32>
    %cst_17 = arith.constant dense<0.000000e+00> : vector<32xf32>
    %47 = vector.multi_reduction <add>, %46, %cst_17 [0] : vector<8x32xf32> to vector<32xf32>
    %48 = vector.shape_cast %47 : vector<32xf32> to vector<1x32xf32>
    %cst_18 = arith.constant 8.000000e+00 : f32
    %49 = vector.broadcast %cst_18 : f32 to vector<1x32xf32>
    %50 = arith.divf %48, %49 : vector<1x32xf32>
    %51 = arith.mulf %46, %46 : vector<8x32xf32>
    %cst_19 = arith.constant dense<0.000000e+00> : vector<32xf32>
    %52 = vector.multi_reduction <add>, %51, %cst_19 [0] : vector<8x32xf32> to vector<32xf32>
    %53 = vector.shape_cast %52 : vector<32xf32> to vector<1x32xf32>
    %cst_20 = arith.constant 8.000000e+00 : f32
    %54 = vector.broadcast %cst_20 : f32 to vector<1x32xf32>
    %55 = arith.divf %53, %54 : vector<1x32xf32>
    %56 = arith.mulf %50, %50 : vector<1x32xf32>
    %57 = arith.subf %55, %56 : vector<1x32xf32>
    %cst_21 = arith.constant 9.99999974E-6 : f32
    %58 = vector.broadcast %cst_21 : f32 to vector<1x32xf32>
    %59 = arith.addf %57, %58 : vector<1x32xf32>
    %60 = math.rsqrt %59 : vector<1x32xf32>
    %c0_22 = arith.constant 0 : index
    %c0_23 = arith.constant 0 : index
    %61 = vector.load %arg5[%c0_22, %c0_23] : memref<1x32xf32, #tpu.memory_space<vmem>>, vector<1x32xf32>
    %62 = arith.mulf %60, %61 : vector<1x32xf32>
    %c0_24 = arith.constant 0 : index
    %c0_25 = arith.constant 0 : index
    %63 = vector.load %arg6[%c0_24, %c0_25] : memref<1x32xf32, #tpu.memory_space<vmem>>, vector<1x32xf32>
    %64 = arith.mulf %50, %62 : vector<1x32xf32>
    %65 = arith.subf %63, %64 : vector<1x32xf32>
    %66 = vector.broadcast %62 : vector<1x32xf32> to vector<8x32xf32>
    %67 = arith.mulf %46, %66 : vector<8x32xf32>
    %68 = vector.broadcast %65 : vector<1x32xf32> to vector<8x32xf32>
    %69 = arith.addf %67, %68 : vector<8x32xf32>
    %cst_26 = arith.constant 0.000000e+00 : f32
    %70 = vector.broadcast %cst_26 : f32 to vector<8x32xf32>
    %71 = arith.maximumf %69, %70 : vector<8x32xf32>
    %c0_27 = arith.constant 0 : index
    %c0_28 = arith.constant 0 : index
    %72 = vector.load %arg7[%c0_27, %c0_28] : memref<8x32xf32, #tpu.memory_space<vmem>>, vector<8x32xf32>
    tpu.vector_store %arg7[%c0_27, %c0_28], %71 {strides = array<i32>} : memref<8x32xf32, #tpu.memory_space<vmem>>, vector<8x32xf32>,
    return
  }
}

</mosaic_0001>

<llo_original>
// kernel: temporal_network.1
$region0: #{temporal_network.1}
  #allocation0 [shape = 'u32[]', space=smem, size = 0x4, offset = 0x4, fixed_abs, tag = 'smem constant byte address 0x4 - core index']
  #allocation1 [shape = 'u32[72,128]{1,0:T(1,128)}', space=vmem, size = 0x9000, scoped, tag = 'internal scratch']
  %s0 = inlined_call_operand.vmem [shape: f32[4,32], index: 0, kind: input, shape index: {}]
  %s1 = inlined_call_operand.vmem [shape: bf16[32,2048], index: 1, kind: input, shape index: {}]
  %s2 = inlined_call_operand.vmem [shape: f32[1,1024], index: 2, kind: input, shape index: {}]
  %s3 = inlined_call_operand.vmem [shape: f32[1,1024], index: 3, kind: input, shape index: {}]
  %s4 = inlined_call_operand.vmem [shape: bf16[1024,32], index: 4, kind: input, shape index: {}]
  %s5 = inlined_call_operand.vmem [shape: f32[1,32], index: 5, kind: input, shape index: {}]
  %s6 = inlined_call_operand.vmem [shape: f32[1,32], index: 6, kind: input, shape index: {}]
  %s7 = inlined_call_operand.vmem [shape: f32[8,32], index: 7, kind: output, shape index: {}]
  %s8 = sld [smem:[#allocation0]]
  $region38: #{temporal_network.1} parent=0
    _
  %s10 = ssub.s32 1, %s8
  %s11 = scalar_select 0, %s10, %s8
  // Predicated region
  $region2: #{temporal_network.1} parent=0 // pred_check
    _
  $region3: #{temporal_network.1} parent=0 // pred_check_branch
    %13 = sbr.rel (0) target = $region5
  $region4: #{temporal_network.1} parent=0 // pred_region
    _
  $region5: #{temporal_network.1} parent=0 // pred_fallthru
    _
  // Predicated region
  $region6: #{temporal_network.1} parent=0 // pred_check
    _
  $region7: #{temporal_network.1} parent=0 // pred_check_branch
    %15 = sbr.rel (0) target = $region9
  $region8: #{temporal_network.1} parent=0 // pred_region
    _
  $region9: #{temporal_network.1} parent=0 // pred_fallthru
    _
  // Predicated region
  $region10: #{temporal_network.1} parent=0 // pred_check
    _
  $region11: #{temporal_network.1} parent=0 // pred_check_branch
    %17 = sbr.rel (0) target = $region13
  $region12: #{temporal_network.1} parent=0 // pred_region
    _
  $region13: #{temporal_network.1} parent=0 // pred_fallthru
    _
  // Predicated region
  $region14: #{temporal_network.1} parent=0 // pred_check
    _
  $region15: #{temporal_network.1} parent=0 // pred_check_branch
    %19 = sbr.rel (0) target = $region17
  $region16: #{temporal_network.1} parent=0 // pred_region
    _
  $region17: #{temporal_network.1} parent=0 // pred_fallthru
    _
  // Predicated region
  $region18: #{temporal_network.1} parent=0 // pred_check
    _
  $region19: #{temporal_network.1} parent=0 // pred_check_branch
    %21 = sbr.rel (0) target = $region21
  $region20: #{temporal_network.1} parent=0 // pred_region
    _
  $region21: #{temporal_network.1} parent=0 // pred_fallthru
    _
  // Predicated region
  $region22: #{temporal_network.1} parent=0 // pred_check
    _
  $region23: #{temporal_network.1} parent=0 // pred_check_branch
    %23 = sbr.rel (0) target = $region25
  $region24: #{temporal_network.1} parent=0 // pred_region
    _
  $region25: #{temporal_network.1} parent=0 // pred_fallthru
    _
  // Predicated region
  $region26: #{temporal_network.1} parent=0 // pred_check
    _
  $region27: #{temporal_network.1} parent=0 // pred_check_branch
    %25 = sbr.rel (0) target = $region29
  $region28: #{temporal_network.1} parent=0 // pred_region
    _
  $region29: #{temporal_network.1} parent=0 // pred_fallthru
    _
  %v27 = vld [vmem:[%s0] sm:$0xf]
  %v28 = vpack.c.bf16 %v27, %v27
  %v29 = vld [vmem:[%s1] sm:$0xff]
  %v30 = vld [vmem:[%s1 + $0x8] sm:$0xff]
  %v31 = vld [vmem:[%s1 + $0x10] sm:$0xff]
  %v32 = vld [vmem:[%s1 + $0x18] sm:$0xff]
  %v33 = vld [vmem:[%s1 + $0x20] sm:$0xff]
  %v34 = vld [vmem:[%s1 + $0x28] sm:$0xff]
  %v35 = vld [vmem:[%s1 + $0x30] sm:$0xff]
  %v36 = vld [vmem:[%s1 + $0x38] sm:$0xff]
  %v37 = vld [vmem:[%s1 + $0x40] sm:$0xff]
  %v38 = vld [vmem:[%s1 + $0x48] sm:$0xff]
  %v39 = vld [vmem:[%s1 + $0x50] sm:$0xff]
  %v40 = vld [vmem:[%s1 + $0x58] sm:$0xff]
  %v41 = vld [vmem:[%s1 + $0x60] sm:$0xff]
  %v42 = vld [vmem:[%s1 + $0x68] sm:$0xff]
  %v43 = vld [vmem:[%s1 + $0x70] sm:$0xff]
  %v44 = vld [vmem:[%s1 + $0x78] sm:$0xff]
  %v45 = vld [vmem:[%s1 + $0x80] sm:$0xff]
  %v46 = vld [vmem:[%s1 + $0x88] sm:$0xff]
  %v47 = vld [vmem:[%s1 + $0x90] sm:$0xff]
  %v48 = vld [vmem:[%s1 + $0x98] sm:$0xff]
  %v49 = vld [vmem:[%s1 + $0xa0] sm:$0xff]
  %v50 = vld [vmem:[%s1 + $0xa8] sm:$0xff]
  %v51 = vld [vmem:[%s1 + $0xb0] sm:$0xff]
  %v52 = vld [vmem:[%s1 + $0xb8] sm:$0xff]
  %v53 = vld [vmem:[%s1 + $0xc0] sm:$0xff]
  %v54 = vld [vmem:[%s1 + $0xc8] sm:$0xff]
  %v55 = vld [vmem:[%s1 + $0xd0] sm:$0xff]
  %v56 = vld [vmem:[%s1 + $0xd8] sm:$0xff]
  %v57 = vld [vmem:[%s1 + $0xe0] sm:$0xff]
  %v58 = vld [vmem:[%s1 + $0xe8] sm:$0xff]
  %v59 = vld [vmem:[%s1 + $0xf0] sm:$0xff]
  %v60 = vld [vmem:[%s1 + $0xf8] sm:$0xff]
  %v93 = vunpack.c.l.b16 %v29
  %v94 = vunpack.c.h.b16 %v29
  %v95 = vunpack.c.l.b16 %v30
  %v96 = vunpack.c.h.b16 %v30
  %v97 = vunpack.c.l.b16 %v31
  %v98 = vunpack.c.h.b16 %v31
  %v99 = vunpack.c.l.b16 %v32
  %v100 = vunpack.c.h.b16 %v32
  %v101 = vunpack.c.l.b16 %v33
  %v102 = vunpack.c.h.b16 %v33
  %v103 = vunpack.c.l.b16 %v34
  %v104 = vunpack.c.h.b16 %v34
  %v105 = vunpack.c.l.b16 %v35
  %v106 = vunpack.c.h.b16 %v35
  %v107 = vunpack.c.l.b16 %v36
  %v108 = vunpack.c.h.b16 %v36
  %v109 = vunpack.c.l.b16 %v37
  %v110 = vunpack.c.h.b16 %v37
  %v111 = vunpack.c.l.b16 %v38
  %v112 = vunpack.c.h.b16 %v38
  %v113 = vunpack.c.l.b16 %v39
  %v114 = vunpack.c.h.b16 %v39
  %v115 = vunpack.c.l.b16 %v40
  %v116 = vunpack.c.h.b16 %v40
  %v117 = vunpack.c.l.b16 %v41
  %v118 = vunpack.c.h.b16 %v41
  %v119 = vunpack.c.l.b16 %v42
  %v120 = vunpack.c.h.b16 %v42
  %v121 = vunpack.c.l.b16 %v43
  %v122 = vunpack.c.h.b16 %v43
  %v123 = vunpack.c.l.b16 %v44
  %v124 = vunpack.c.h.b16 %v44
  %v125 = vunpack.c.l.b16 %v45
  %v126 = vunpack.c.h.b16 %v45
  %v127 = vunpack.c.l.b16 %v46
  %v128 = vunpack.c.h.b16 %v46
  %v129 = vunpack.c.l.b16 %v47
  %v130 = vunpack.c.h.b16 %v47
  %v131 = vunpack.c.l.b16 %v48
  %v132 = vunpack.c.h.b16 %v48
  %v133 = vunpack.c.l.b16 %v49
  %v134 = vunpack.c.h.b16 %v49
  %v135 = vunpack.c.l.b16 %v50
  %v136 = vunpack.c.h.b16 %v50
  %v137 = vunpack.c.l.b16 %v51
  %v138 = vunpack.c.h.b16 %v51
  %v139 = vunpack.c.l.b16 %v52
  %v140 = vunpack.c.h.b16 %v52
  %v141 = vunpack.c.l.b16 %v53
  %v142 = vunpack.c.h.b16 %v53
  %v143 = vunpack.c.l.b16 %v54
  %v144 = vunpack.c.h.b16 %v54
  %v145 = vunpack.c.l.b16 %v55
  %v146 = vunpack.c.h.b16 %v55
  %v147 = vunpack.c.l.b16 %v56
  %v148 = vunpack.c.h.b16 %v56
  %v149 = vunpack.c.l.b16 %v57
  %v150 = vunpack.c.h.b16 %v57
  %v151 = vunpack.c.l.b16 %v58
  %v152 = vunpack.c.h.b16 %v58
  %v153 = vunpack.c.l.b16 %v59
  %v154 = vunpack.c.h.b16 %v59
  %v155 = vunpack.c.l.b16 %v60
  %v156 = vunpack.c.h.b16 %v60
  %v157 = vpack.c.b16 %v109, %v93
  %v158 = vpack.c.b16 %v110, %v94
  %v159 = vpack.c.b16 %v111, %v95
  %v160 = vpack.c.b16 %v112, %v96
  %v161 = vpack.c.b16 %v113, %v97
  %v162 = vpack.c.b16 %v114, %v98
  %v163 = vpack.c.b16 %v115, %v99
  %v164 = vpack.c.b16 %v116, %v100
  %v165 = vpack.c.b16 %v117, %v101
  %v166 = vpack.c.b16 %v118, %v102
  %v167 = vpack.c.b16 %v119, %v103
  %v168 = vpack.c.b16 %v120, %v104
  %v169 = vpack.c.b16 %v121, %v105
  %v170 = vpack.c.b16 %v122, %v106
  %v171 = vpack.c.b16 %v123, %v107
  %v172 = vpack.c.b16 %v124, %v108
  %v173 = vpack.c.b16 %v141, %v125
  %v174 = vpack.c.b16 %v142, %v126
  %v175 = vpack.c.b16 %v143, %v127
  %v176 = vpack.c.b16 %v144, %v128
  %v177 = vpack.c.b16 %v145, %v129
  %v178 = vpack.c.b16 %v146, %v130
  %v179 = vpack.c.b16 %v147, %v131
  %v180 = vpack.c.b16 %v148, %v132
  %v181 = vpack.c.b16 %v149, %v133
  %v182 = vpack.c.b16 %v150, %v134
  %v183 = vpack.c.b16 %v151, %v135
  %v184 = vpack.c.b16 %v152, %v136
  %v185 = vpack.c.b16 %v153, %v137
  %v186 = vpack.c.b16 %v154, %v138
  %v187 = vpack.c.b16 %v155, %v139
  %v188 = vpack.c.b16 %v156, %v140
  %vm221 = vcmask 261120
  %v223 = vsel %vm221, %v28, 0
  %225 = vmatpush.bf16.msra.mxu0 0
  %226 = vmatpush.bf16.msra.mxu0 0
  %227 = vmatpush.bf16.msra.mxu0 0
  %228 = vmatpush.bf16.msra.mxu0 0
  %229 = vmatpush.bf16.msra.mxu0 0
  %230 = vmatpush.bf16.msra.mxu0 0
  %231 = vmatpush.bf16.msra.mxu0 %v173
  %232 = vmatpush.bf16.msra.mxu0 %v157
  %233 = vmatmul.bf16.gmra.mxu0 %v223
  %v234 = vpop.f32.mrf.mxu0
  %v235 = vadd.f32 0.0, %v234
  %v236 = vpop.f32.mrf.mxu0
  %237 = vdwg.mxu0
  %238 = vmatpush.bf16.msra.mxu0 0
  %239 = vmatpush.bf16.msra.mxu0 0
  %240 = vmatpush.bf16.msra.mxu0 0
  %241 = vmatpush.bf16.msra.mxu0 0
  %242 = vmatpush.bf16.msra.mxu0 0
  %243 = vmatpush.bf16.msra.mxu0 0
  %244 = vmatpush.bf16.msra.mxu0 %v174
  %245 = vmatpush.bf16.msra.mxu0 %v158
  %246 = vmatmul.bf16.gmra.mxu0 %v223
  %v247 = vpop.f32.mrf.mxu0
  %v248 = vadd.f32 0.0, %v247
  %v249 = vpop.f32.mrf.mxu0
  %250 = vdwg.mxu0
  %251 = vmatpush.bf16.msra.mxu0 0
  %252 = vmatpush.bf16.msra.mxu0 0
  %253 = vmatpush.bf16.msra.mxu0 0
  %254 = vmatpush.bf16.msra.mxu0 0
  %255 = vmatpush.bf16.msra.mxu0 0
  %256 = vmatpush.bf16.msra.mxu0 0
  %257 = vmatpush.bf16.msra.mxu0 %v175
  %258 = vmatpush.bf16.msra.mxu0 %v159
  %259 = vmatmul.bf16.gmra.mxu0 %v223
  %v260 = vpop.f32.mrf.mxu0
  %v261 = vadd.f32 0.0, %v260
  %v262 = vpop.f32.mrf.mxu0
  %263 = vdwg.mxu0
  %264 = vmatpush.bf16.msra.mxu0 0
  %265 = vmatpush.bf16.msra.mxu0 0
  %266 = vmatpush.bf16.msra.mxu0 0
  %267 = vmatpush.bf16.msra.mxu0 0
  %268 = vmatpush.bf16.msra.mxu0 0
  %269 = vmatpush.bf16.msra.mxu0 0
  %270 = vmatpush.bf16.msra.mxu0 %v176
  %271 = vmatpush.bf16.msra.mxu0 %v160
  %272 = vmatmul.bf16.gmra.mxu0 %v223
  %v273 = vpop.f32.mrf.mxu0
  %v274 = vadd.f32 0.0, %v273
  %v275 = vpop.f32.mrf.mxu0
  %276 = vdwg.mxu0
  %277 = vmatpush.bf16.msra.mxu0 0
  %278 = vmatpush.bf16.msra.mxu0 0
  %279 = vmatpush.bf16.msra.mxu0 0
  %280 = vmatpush.bf16.msra.mxu0 0
  %281 = vmatpush.bf16.msra.mxu0 0
  %282 = vmatpush.bf16.msra.mxu0 0
  %283 = vmatpush.bf16.msra.mxu0 %v177
  %284 = vmatpush.bf16.msra.mxu0 %v161
  %285 = vmatmul.bf16.gmra.mxu0 %v223
  %v286 = vpop.f32.mrf.mxu0
  %v287 = vadd.f32 0.0, %v286
  %v288 = vpop.f32.mrf.mxu0
  %289 = vdwg.mxu0
  %290 = vmatpush.bf16.msra.mxu0 0
  %291 = vmatpush.bf16.msra.mxu0 0
  %292 = vmatpush.bf16.msra.mxu0 0
  %293 = vmatpush.bf16.msra.mxu0 0
  %294 = vmatpush.bf16.msra.mxu0 0
  %295 = vmatpush.bf16.msra.mxu0 0
  %296 = vmatpush.bf16.msra.mxu0 %v178
  %297 = vmatpush.bf16.msra.mxu0 %v162
  %298 = vmatmul.bf16.gmra.mxu0 %v223
  %v299 = vpop.f32.mrf.mxu0
  %v300 = vadd.f32 0.0, %v299
  %v301 = vpop.f32.mrf.mxu0
  %302 = vdwg.mxu0
  %303 = vmatpush.bf16.msra.mxu0 0
  %304 = vmatpush.bf16.msra.mxu0 0
  %305 = vmatpush.bf16.msra.mxu0 0
  %306 = vmatpush.bf16.msra.mxu0 0
  %307 = vmatpush.bf16.msra.mxu0 0
  %308 = vmatpush.bf16.msra.mxu0 0
  %309 = vmatpush.bf16.msra.mxu0 %v179
  %310 = vmatpush.bf16.msra.mxu0 %v163
  %311 = vmatmul.bf16.gmra.mxu0 %v223
  %v312 = vpop.f32.mrf.mxu0
  %v313 = vadd.f32 0.0, %v312
  %v314 = vpop.f32.mrf.mxu0
  %315 = vdwg.mxu0
  %316 = vmatpush.bf16.msra.mxu0 0
  %317 = vmatpush.bf16.msra.mxu0 0
  %318 = vmatpush.bf16.msra.mxu0 0
  %319 = vmatpush.bf16.msra.mxu0 0
  %320 = vmatpush.bf16.msra.mxu0 0
  %321 = vmatpush.bf16.msra.mxu0 0
  %322 = vmatpush.bf16.msra.mxu0 %v180
  %323 = vmatpush.bf16.msra.mxu0 %v164
  %324 = vmatmul.bf16.gmra.mxu0 %v223
  %v325 = vpop.f32.mrf.mxu0
  %v326 = vadd.f32 0.0, %v325
  %v327 = vpop.f32.mrf.mxu0
  %328 = vdwg.mxu0
  %329 = vmatpush.bf16.msra.mxu0 0
  %330 = vmatpush.bf16.msra.mxu0 0
  %331 = vmatpush.bf16.msra.mxu0 0
  %332 = vmatpush.bf16.msra.mxu0 0
  %333 = vmatpush.bf16.msra.mxu0 0
  %334 = vmatpush.bf16.msra.mxu0 0
  %335 = vmatpush.bf16.msra.mxu0 %v181
  %336 = vmatpush.bf16.msra.mxu0 %v165
  %337 = vmatmul.bf16.gmra.mxu0 %v223
  %v338 = vpop.f32.mrf.mxu0
  %v339 = vadd.f32 0.0, %v338
  %v340 = vpop.f32.mrf.mxu0
  %341 = vdwg.mxu0
  %342 = vmatpush.bf16.msra.mxu0 0
  %343 = vmatpush.bf16.msra.mxu0 0
  %344 = vmatpush.bf16.msra.mxu0 0
  %345 = vmatpush.bf16.msra.mxu0 0
  %346 = vmatpush.bf16.msra.mxu0 0
  %347 = vmatpush.bf16.msra.mxu0 0
  %348 = vmatpush.bf16.msra.mxu0 %v182
  %349 = vmatpush.bf16.msra.mxu0 %v166
  %350 = vmatmul.bf16.gmra.mxu0 %v223
  %v351 = vpop.f32.mrf.mxu0
  %v352 = vadd.f32 0.0, %v351
  %v353 = vpop.f32.mrf.mxu0
  %354 = vdwg.mxu0
  %355 = vmatpush.bf16.msra.mxu0 0
  %356 = vmatpush.bf16.msra.mxu0 0
  %357 = vmatpush.bf16.msra.mxu0 0
  %358 = vmatpush.bf16.msra.mxu0 0
  %359 = vmatpush.bf16.msra.mxu0 0
  %360 = vmatpush.bf16.msra.mxu0 0
  %361 = vmatpush.bf16.msra.mxu0 %v183
  %362 = vmatpush.bf16.msra.mxu0 %v167
  %363 = vmatmul.bf16.gmra.mxu0 %v223
  %v364 = vpop.f32.mrf.mxu0
  %v365 = vadd.f32 0.0, %v364
  %v366 = vpop.f32.mrf.mxu0
  %367 = vdwg.mxu0
  %368 = vmatpush.bf16.msra.mxu0 0
  %369 = vmatpush.bf16.msra.mxu0 0
  %370 = vmatpush.bf16.msra.mxu0 0
  %371 = vmatpush.bf16.msra.mxu0 0
  %372 = vmatpush.bf16.msra.mxu0 0
  %373 = vmatpush.bf16.msra.mxu0 0
  %374 = vmatpush.bf16.msra.mxu0 %v184
  %375 = vmatpush.bf16.msra.mxu0 %v168
  %376 = vmatmul.bf16.gmra.mxu0 %v223
  %v377 = vpop.f32.mrf.mxu0
  %v378 = vadd.f32 0.0, %v377
  %v379 = vpop.f32.mrf.mxu0
  %380 = vdwg.mxu0
  %381 = vmatpush.bf16.msra.mxu0 0
  %382 = vmatpush.bf16.msra.mxu0 0
  %383 = vmatpush.bf16.msra.mxu0 0
  %384 = vmatpush.bf16.msra.mxu0 0
  %385 = vmatpush.bf16.msra.mxu0 0
  %386 = vmatpush.bf16.msra.mxu0 0
  %387 = vmatpush.bf16.msra.mxu0 %v185
  %388 = vmatpush.bf16.msra.mxu0 %v169
  %389 = vmatmul.bf16.gmra.mxu0 %v223
  %v390 = vpop.f32.mrf.mxu0
  %v391 = vadd.f32 0.0, %v390
  %v392 = vpop.f32.mrf.mxu0
  %393 = vdwg.mxu0
  %394 = vmatpush.bf16.msra.mxu0 0
  %395 = vmatpush.bf16.msra.mxu0 0
  %396 = vmatpush.bf16.msra.mxu0 0
  %397 = vmatpush.bf16.msra.mxu0 0
  %398 = vmatpush.bf16.msra.mxu0 0
  %399 = vmatpush.bf16.msra.mxu0 0
  %400 = vmatpush.bf16.msra.mxu0 %v186
  %401 = vmatpush.bf16.msra.mxu0 %v170
  %402 = vmatmul.bf16.gmra.mxu0 %v223
  %v403 = vpop.f32.mrf.mxu0
  %v404 = vadd.f32 0.0, %v403
  %v405 = vpop.f32.mrf.mxu0
  %406 = vdwg.mxu0
  %407 = vmatpush.bf16.msra.mxu0 0
  %408 = vmatpush.bf16.msra.mxu0 0
  %409 = vmatpush.bf16.msra.mxu0 0
  %410 = vmatpush.bf16.msra.mxu0 0
  %411 = vmatpush.bf16.msra.mxu0 0
  %412 = vmatpush.bf16.msra.mxu0 0
  %413 = vmatpush.bf16.msra.mxu0 %v187
  %414 = vmatpush.bf16.msra.mxu0 %v171
  %415 = vmatmul.bf16.gmra.mxu0 %v223
  %v416 = vpop.f32.mrf.mxu0
  %v417 = vadd.f32 0.0, %v416
  %v418 = vpop.f32.mrf.mxu0
  %419 = vdwg.mxu0
  %420 = vmatpush.bf16.msra.mxu0 0
  %421 = vmatpush.bf16.msra.mxu0 0
  %422 = vmatpush.bf16.msra.mxu0 0
  %423 = vmatpush.bf16.msra.mxu0 0
  %424 = vmatpush.bf16.msra.mxu0 0
  %425 = vmatpush.bf16.msra.mxu0 0
  %426 = vmatpush.bf16.msra.mxu0 %v188
  %427 = vmatpush.bf16.msra.mxu0 %v172
  %428 = vmatmul.bf16.gmra.mxu0 %v223
  %v429 = vpop.f32.mrf.mxu0
  %v430 = vadd.f32 0.0, %v429
  %v431 = vpop.f32.mrf.mxu0
  %432 = vdwg.mxu0
  %vm433 = vcmask 1043456
  %v434 = vsel %vm433, %v235, 0.0
  %v435 = vrot.slane %v434, 4
  %v436 = vadd.f32 %v434, %v435
  %v437 = vrot.slane %v436, 2
  %v438 = vadd.f32 %v436, %v437
  %v439 = vrot.slane %v438, 1
  %v440 = vadd.f32 %v438, %v439
  %v441 = vsel %vm433, %v248, 0.0
  %v442 = vrot.slane %v441, 4
  %v443 = vadd.f32 %v441, %v442
  %v444 = vrot.slane %v443, 2
  %v445 = vadd.f32 %v443, %v444
  %v446 = vrot.slane %v445, 1
  %v447 = vadd.f32 %v445, %v446
  %v448 = vsel %vm433, %v261, 0.0
  %v449 = vrot.slane %v448, 4
  %v450 = vadd.f32 %v448, %v449
  %v451 = vrot.slane %v450, 2
  %v452 = vadd.f32 %v450, %v451
  %v453 = vrot.slane %v452, 1
  %v454 = vadd.f32 %v452, %v453
  %v455 = vsel %vm433, %v274, 0.0
  %v456 = vrot.slane %v455, 4
  %v457 = vadd.f32 %v455, %v456
  %v458 = vrot.slane %v457, 2
  %v459 = vadd.f32 %v457, %v458
  %v460 = vrot.slane %v459, 1
  %v461 = vadd.f32 %v459, %v460
  %v462 = vsel %vm433, %v287, 0.0
  %v463 = vrot.slane %v462, 4
  %v464 = vadd.f32 %v462, %v463
  %v465 = vrot.slane %v464, 2
  %v466 = vadd.f32 %v464, %v465
  %v467 = vrot.slane %v466, 1
  %v468 = vadd.f32 %v466, %v467
  %v469 = vsel %vm433, %v300, 0.0
  %v470 = vrot.slane %v469, 4
  %v471 = vadd.f32 %v469, %v470
  %v472 = vrot.slane %v471, 2
  %v473 = vadd.f32 %v471, %v472
  %v474 = vrot.slane %v473, 1
  %v475 = vadd.f32 %v473, %v474
  %v476 = vsel %vm433, %v313, 0.0
  %v477 = vrot.slane %v476, 4
  %v478 = vadd.f32 %v476, %v477
  %v479 = vrot.slane %v478, 2
  %v480 = vadd.f32 %v478, %v479
  %v481 = vrot.slane %v480, 1
  %v482 = vadd.f32 %v480, %v481
  %v483 = vsel %vm433, %v326, 0.0
  %v484 = vrot.slane %v483, 4
  %v485 = vadd.f32 %v483, %v484
  %v486 = vrot.slane %v485, 2
  %v487 = vadd.f32 %v485, %v486
  %v488 = vrot.slane %v487, 1
  %v489 = vadd.f32 %v487, %v488
  %v490 = vsel %vm433, %v339, 0.0
  %v491 = vrot.slane %v490, 4
  %v492 = vadd.f32 %v490, %v491
  %v493 = vrot.slane %v492, 2
  %v494 = vadd.f32 %v492, %v493
  %v495 = vrot.slane %v494, 1
  %v496 = vadd.f32 %v494, %v495
  %v497 = vsel %vm433, %v352, 0.0
  %v498 = vrot.slane %v497, 4
  %v499 = vadd.f32 %v497, %v498
  %v500 = vrot.slane %v499, 2
  %v501 = vadd.f32 %v499, %v500
  %v502 = vrot.slane %v501, 1
  %v503 = vadd.f32 %v501, %v502
  %v504 = vsel %vm433, %v365, 0.0
  %v505 = vrot.slane %v504, 4
  %v506 = vadd.f32 %v504, %v505
  %v507 = vrot.slane %v506, 2
  %v508 = vadd.f32 %v506, %v507
  %v509 = vrot.slane %v508, 1
  %v510 = vadd.f32 %v508, %v509
  %v511 = vsel %vm433, %v378, 0.0
  %v512 = vrot.slane %v511, 4
  %v513 = vadd.f32 %v511, %v512
  %v514 = vrot.slane %v513, 2
  %v515 = vadd.f32 %v513, %v514
  %v516 = vrot.slane %v515, 1
  %v517 = vadd.f32 %v515, %v516
  %v518 = vsel %vm433, %v391, 0.0
  %v519 = vrot.slane %v518, 4
  %v520 = vadd.f32 %v518, %v519
  %v521 = vrot.slane %v520, 2
  %v522 = vadd.f32 %v520, %v521
  %v523 = vrot.slane %v522, 1
  %v524 = vadd.f32 %v522, %v523
  %v525 = vsel %vm433, %v404, 0.0
  %v526 = vrot.slane %v525, 4
  %v527 = vadd.f32 %v525, %v526
  %v528 = vrot.slane %v527, 2
  %v529 = vadd.f32 %v527, %v528
  %v530 = vrot.slane %v529, 1
  %v531 = vadd.f32 %v529, %v530
  %v532 = vsel %vm433, %v417, 0.0
  %v533 = vrot.slane %v532, 4
  %v534 = vadd.f32 %v532, %v533
  %v535 = vrot.slane %v534, 2
  %v536 = vadd.f32 %v534, %v535
  %v537 = vrot.slane %v536, 1
  %v538 = vadd.f32 %v536, %v537
  %v539 = vsel %vm433, %v430, 0.0
  %v540 = vrot.slane %v539, 4
  %v541 = vadd.f32 %v539, %v540
  %v542 = vrot.slane %v541, 2
  %v543 = vadd.f32 %v541, %v542
  %v544 = vrot.slane %v543, 1
  %v545 = vadd.f32 %v543, %v544
  %v546 = vmul.f32 %v235, %v235
  %v547 = vmul.f32 %v248, %v248
  %v548 = vmul.f32 %v261, %v261
  %v549 = vmul.f32 %v274, %v274
  %v550 = vmul.f32 %v287, %v287
  %v551 = vmul.f32 %v300, %v300
  %v552 = vmul.f32 %v313, %v313
  %v553 = vmul.f32 %v326, %v326
  %v554 = vmul.f32 %v339, %v339
  %v555 = vmul.f32 %v352, %v352
  %v556 = vmul.f32 %v365, %v365
  %v557 = vmul.f32 %v378, %v378
  %v558 = vmul.f32 %v391, %v391
  %v559 = vmul.f32 %v404, %v404
  %v560 = vmul.f32 %v417, %v417
  %v561 = vmul.f32 %v430, %v430
  %v562 = vsel %vm433, %v546, 0.0
  %v563 = vrot.slane %v562, 4
  %v564 = vadd.f32 %v562, %v563
  %v565 = vrot.slane %v564, 2
  %v566 = vadd.f32 %v564, %v565
  %v567 = vrot.slane %v566, 1
  %v568 = vadd.f32 %v566, %v567
  %v569 = vsel %vm433, %v547, 0.0
  %v570 = vrot.slane %v569, 4
  %v571 = vadd.f32 %v569, %v570
  %v572 = vrot.slane %v571, 2
  %v573 = vadd.f32 %v571, %v572
  %v574 = vrot.slane %v573, 1
  %v575 = vadd.f32 %v573, %v574
  %v576 = vsel %vm433, %v548, 0.0
  %v577 = vrot.slane %v576, 4
  %v578 = vadd.f32 %v576, %v577
  %v579 = vrot.slane %v578, 2
  %v580 = vadd.f32 %v578, %v579
  %v581 = vrot.slane %v580, 1
  %v582 = vadd.f32 %v580, %v581
  %v583 = vsel %vm433, %v549, 0.0
  %v584 = vrot.slane %v583, 4
  %v585 = vadd.f32 %v583, %v584
  %v586 = vrot.slane %v585, 2
  %v587 = vadd.f32 %v585, %v586
  %v588 = vrot.slane %v587, 1
  %v589 = vadd.f32 %v587, %v588
  %v590 = vsel %vm433, %v550, 0.0
  %v591 = vrot.slane %v590, 4
  %v592 = vadd.f32 %v590, %v591
  %v593 = vrot.slane %v592, 2
  %v594 = vadd.f32 %v592, %v593
  %v595 = vrot.slane %v594, 1
  %v596 = vadd.f32 %v594, %v595
  %v597 = vsel %vm433, %v551, 0.0
  %v598 = vrot.slane %v597, 4
  %v599 = vadd.f32 %v597, %v598
  %v600 = vrot.slane %v599, 2
  %v601 = vadd.f32 %v599, %v600
  %v602 = vrot.slane %v601, 1
  %v603 = vadd.f32 %v601, %v602
  %v604 = vsel %vm433, %v552, 0.0
  %v605 = vrot.slane %v604, 4
  %v606 = vadd.f32 %v604, %v605
  %v607 = vrot.slane %v606, 2
  %v608 = vadd.f32 %v606, %v607
  %v609 = vrot.slane %v608, 1
  %v610 = vadd.f32 %v608, %v609
  %v611 = vsel %vm433, %v553, 0.0
  %v612 = vrot.slane %v611, 4
  %v613 = vadd.f32 %v611, %v612
  %v614 = vrot.slane %v613, 2
  %v615 = vadd.f32 %v613, %v614
  %v616 = vrot.slane %v615, 1
  %v617 = vadd.f32 %v615, %v616
  %v618 = vsel %vm433, %v554, 0.0
  %v619 = vrot.slane %v618, 4
  %v620 = vadd.f32 %v618, %v619
  %v621 = vrot.slane %v620, 2
  %v622 = vadd.f32 %v620, %v621
  %v623 = vrot.slane %v622, 1
  %v624 = vadd.f32 %v622, %v623
  %v625 = vsel %vm433, %v555, 0.0
  %v626 = vrot.slane %v625, 4
  %v627 = vadd.f32 %v625, %v626
  %v628 = vrot.slane %v627, 2
  %v629 = vadd.f32 %v627, %v628
  %v630 = vrot.slane %v629, 1
  %v631 = vadd.f32 %v629, %v630
  %v632 = vsel %vm433, %v556, 0.0
  %v633 = vrot.slane %v632, 4
  %v634 = vadd.f32 %v632, %v633
  %v635 = vrot.slane %v634, 2
  %v636 = vadd.f32 %v634, %v635
  %v637 = vrot.slane %v636, 1
  %v638 = vadd.f32 %v636, %v637
  %v639 = vsel %vm433, %v557, 0.0
  %v640 = vrot.slane %v639, 4
  %v641 = vadd.f32 %v639, %v640
  %v642 = vrot.slane %v641, 2
  %v643 = vadd.f32 %v641, %v642
  %v644 = vrot.slane %v643, 1
  %v645 = vadd.f32 %v643, %v644
  %v646 = vsel %vm433, %v558, 0.0
  %v647 = vrot.slane %v646, 4
  %v648 = vadd.f32 %v646, %v647
  %v649 = vrot.slane %v648, 2
  %v650 = vadd.f32 %v648, %v649
  %v651 = vrot.slane %v650, 1
  %v652 = vadd.f32 %v650, %v651
  %v653 = vsel %vm433, %v559, 0.0
  %v654 = vrot.slane %v653, 4
  %v655 = vadd.f32 %v653, %v654
  %v656 = vrot.slane %v655, 2
  %v657 = vadd.f32 %v655, %v656
  %v658 = vrot.slane %v657, 1
  %v659 = vadd.f32 %v657, %v658
  %v660 = vsel %vm433, %v560, 0.0
  %v661 = vrot.slane %v660, 4
  %v662 = vadd.f32 %v660, %v661
  %v663 = vrot.slane %v662, 2
  %v664 = vadd.f32 %v662, %v663
  %v665 = vrot.slane %v664, 1
  %v666 = vadd.f32 %v664, %v665
  %v667 = vsel %vm433, %v561, 0.0
  %v668 = vrot.slane %v667, 4
  %v669 = vadd.f32 %v667, %v668
  %v670 = vrot.slane %v669, 2
  %v671 = vadd.f32 %v669, %v670
  %v672 = vrot.slane %v671, 1
  %v673 = vadd.f32 %v671, %v672
  %v674 = vadd.f32 %v440, %v496
  %v675 = vadd.f32 %v447, %v503
  %v676 = vadd.f32 %v454, %v510
  %v677 = vadd.f32 %v461, %v517
  %v678 = vadd.f32 %v468, %v524
  %v679 = vadd.f32 %v475, %v531
  %v680 = vadd.f32 %v482, %v538
  %v681 = vadd.f32 %v489, %v545
  %v682 = vrcp.pop 8.0
  %v683 = vmul.f32 8.0, %v682
  %v684 = vsub.f32 1.0, %v683
  %v685 = vmul.f32 %v682, %v684
  %v686 = vadd.f32 %v682, %v685
  %vm687 = vweird.f32 %v682
  %v688 = vsel %vm687, %v682, %v686
  %v689 = vmul.f32 %v674, %v688
  %v690 = vmul.f32 %v675, %v688
  %v691 = vmul.f32 %v676, %v688
  %v692 = vmul.f32 %v677, %v688
  %v693 = vmul.f32 %v678, %v688
  %v694 = vmul.f32 %v679, %v688
  %v695 = vmul.f32 %v680, %v688
  %v696 = vmul.f32 %v681, %v688
  %v697 = vadd.f32 %v568, %v624
  %v698 = vadd.f32 %v575, %v631
  %v699 = vadd.f32 %v582, %v638
  %v700 = vadd.f32 %v589, %v645
  %v701 = vadd.f32 %v596, %v652
  %v702 = vadd.f32 %v603, %v659
  %v703 = vadd.f32 %v610, %v666
  %v704 = vadd.f32 %v617, %v673
  %v705 = vmul.f32 %v697, %v688
  %v706 = vmul.f32 %v698, %v688
  %v707 = vmul.f32 %v699, %v688
  %v708 = vmul.f32 %v700, %v688
  %v709 = vmul.f32 %v701, %v688
  %v710 = vmul.f32 %v702, %v688
  %v711 = vmul.f32 %v703, %v688
  %v712 = vmul.f32 %v704, %v688
  %v713 = vmul.f32 %v689, %v689
  %v714 = vmul.f32 %v690, %v690
  %v715 = vmul.f32 %v691, %v691
  %v716 = vmul.f32 %v692, %v692
  %v717 = vmul.f32 %v693, %v693
  %v718 = vmul.f32 %v694, %v694
  %v719 = vmul.f32 %v695, %v695
  %v720 = vmul.f32 %v696, %v696
  %v721 = vsub.f32 %v705, %v713
  %v722 = vsub.f32 %v706, %v714
  %v723 = vsub.f32 %v707, %v715
  %v724 = vsub.f32 %v708, %v716
  %v725 = vsub.f32 %v709, %v717
  %v726 = vsub.f32 %v710, %v718
  %v727 = vsub.f32 %v711, %v719
  %v728 = vsub.f32 %v712, %v720
  %v729 = vadd.f32 %v721, 1e-05
  %v730 = vadd.f32 %v722, 1e-05
  %v731 = vadd.f32 %v723, 1e-05
  %v732 = vadd.f32 %v724, 1e-05
  %v733 = vadd.f32 %v725, 1e-05
  %v734 = vadd.f32 %v726, 1e-05
  %v735 = vadd.f32 %v727, 1e-05
  %v736 = vadd.f32 %v728, 1e-05
  %v737 = vrsqrt.pop %v729
  %v738 = vmul.f32 %v737, %v729
  %v739 = vmul.f32 %v738, %v737
  %v740 = vmul.f32 0.5, %v739
  %v741 = vsub.f32 1.5, %v740
  %v742 = vmul.f32 %v737, %v741
  %vm743 = vweird.f32 %v729
  %vm744 = vweird.f32 %v737
  %vm745 = vmor %vm743, %vm744
  %v746 = vsel %vm745, %v737, %v742
  %v747 = vrsqrt.pop %v730
  %v748 = vmul.f32 %v747, %v730
  %v749 = vmul.f32 %v748, %v747
  %v750 = vmul.f32 0.5, %v749
  %v751 = vsub.f32 1.5, %v750
  %v752 = vmul.f32 %v747, %v751
  %vm753 = vweird.f32 %v730
  %vm754 = vweird.f32 %v747
  %vm755 = vmor %vm753, %vm754
  %v756 = vsel %vm755, %v747, %v752
  %v757 = vrsqrt.pop %v731
  %v758 = vmul.f32 %v757, %v731
  %v759 = vmul.f32 %v758, %v757
  %v760 = vmul.f32 0.5, %v759
  %v761 = vsub.f32 1.5, %v760
  %v762 = vmul.f32 %v757, %v761
  %vm763 = vweird.f32 %v731
  %vm764 = vweird.f32 %v757
  %vm765 = vmor %vm763, %vm764
  %v766 = vsel %vm765, %v757, %v762
  %v767 = vrsqrt.pop %v732
  %v768 = vmul.f32 %v767, %v732
  %v769 = vmul.f32 %v768, %v767
  %v770 = vmul.f32 0.5, %v769
  %v771 = vsub.f32 1.5, %v770
  %v772 = vmul.f32 %v767, %v771
  %vm773 = vweird.f32 %v732
  %vm774 = vweird.f32 %v767
  %vm775 = vmor %vm773, %vm774
  %v776 = vsel %vm775, %v767, %v772
  %v777 = vrsqrt.pop %v733
  %v778 = vmul.f32 %v777, %v733
  %v779 = vmul.f32 %v778, %v777
  %v780 = vmul.f32 0.5, %v779
  %v781 = vsub.f32 1.5, %v780
  %v782 = vmul.f32 %v777, %v781
  %vm783 = vweird.f32 %v733
  %vm784 = vweird.f32 %v777
  %vm785 = vmor %vm783, %vm784
  %v786 = vsel %vm785, %v777, %v782
  %v787 = vrsqrt.pop %v734
  %v788 = vmul.f32 %v787, %v734
  %v789 = vmul.f32 %v788, %v787
  %v790 = vmul.f32 0.5, %v789
  %v791 = vsub.f32 1.5, %v790
  %v792 = vmul.f32 %v787, %v791
  %vm793 = vweird.f32 %v734
  %vm794 = vweird.f32 %v787
  %vm795 = vmor %vm793, %vm794
  %v796 = vsel %vm795, %v787, %v792
  %v797 = vrsqrt.pop %v735
  %v798 = vmul.f32 %v797, %v735
  %v799 = vmul.f32 %v798, %v797
  %v800 = vmul.f32 0.5, %v799
  %v801 = vsub.f32 1.5, %v800
  %v802 = vmul.f32 %v797, %v801
  %vm803 = vweird.f32 %v735
  %vm804 = vweird.f32 %v797
  %vm805 = vmor %vm803, %vm804
  %v806 = vsel %vm805, %v797, %v802
  %v807 = vrsqrt.pop %v736
  %v808 = vmul.f32 %v807, %v736
  %v809 = vmul.f32 %v808, %v807
  %v810 = vmul.f32 0.5, %v809
  %v811 = vsub.f32 1.5, %v810
  %v812 = vmul.f32 %v807, %v811
  %vm813 = vweird.f32 %v736
  %vm814 = vweird.f32 %v807
  %vm815 = vmor %vm813, %vm814
  %v816 = vsel %vm815, %v807, %v812
  %v817 = vld [vmem:[%s2] sm:$0xff]
  %v819 = vperm.slane %v817, 0
  %v820 = vperm.slane %v817, 1
  %v821 = vperm.slane %v817, 2
  %v822 = vperm.slane %v817, 3
  %v823 = vperm.slane %v817, 4
  %v824 = vperm.slane %v817, 5
  %v825 = vperm.slane %v817, 6
  %v826 = vperm.slane %v817, 7
  %v835 = vmul.f32 %v746, %v819
  %v836 = vmul.f32 %v756, %v820
  %v837 = vmul.f32 %v766, %v821
  %v838 = vmul.f32 %v776, %v822
  %v839 = vmul.f32 %v786, %v823
  %v840 = vmul.f32 %v796, %v824
  %v841 = vmul.f32 %v806, %v825
  %v842 = vmul.f32 %v816, %v826
  %v843 = vld [vmem:[%s3] sm:$0xff]
  %v844 = vmul.f32 %v689, %v835
  %v845 = vmul.f32 %v690, %v836
  %v846 = vmul.f32 %v691, %v837
  %v847 = vmul.f32 %v692, %v838
  %v848 = vmul.f32 %v693, %v839
  %v849 = vmul.f32 %v694, %v840
  %v850 = vmul.f32 %v695, %v841
  %v851 = vmul.f32 %v696, %v842
  %v860 = vrot.slane %v845, 7
  %v861 = vrot.slane %v846, 6
  %v862 = vrot.slane %v847, 5
  %v863 = vrot.slane %v848, 4
  %v864 = vrot.slane %v849, 3
  %v865 = vrot.slane %v850, 2
  %v866 = vrot.slane %v851, 1
  %vm867 = vcmask 1040384
  %v868 = vsel %vm867, %v844, %v860
  %vm869 = vcmask 1042434
  %v870 = vsel %vm869, %v861, %v862
  %vm871 = vcmask 1041408
  %v872 = vsel %vm871, %v868, %v870
  %vm873 = vcmask 1044484
  %v874 = vsel %vm873, %v863, %v864
  %vm875 = vcmask 1046534
  %v876 = vsel %vm875, %v865, %v866
  %vm877 = vcmask 1045508
  %v878 = vsel %vm877, %v874, %v876
  %v879 = vsel %vm433, %v872, %v878
  %v881 = vsub.f32 %v843, %v879
  %v882 = vperm.slane %v835, 0
  %v883 = vperm.slane %v836, 0
  %v884 = vperm.slane %v837, 0
  %v885 = vperm.slane %v838, 0
  %v886 = vperm.slane %v839, 0
  %v887 = vperm.slane %v840, 0
  %v888 = vperm.slane %v841, 0
  %v889 = vperm.slane %v842, 0
  %v890 = vmul.f32 %v235, %v882
  %v891 = vmul.f32 %v248, %v883
  %v892 = vmul.f32 %v261, %v884
  %v893 = vmul.f32 %v274, %v885
  %v894 = vmul.f32 %v287, %v886
  %v895 = vmul.f32 %v300, %v887
  %v896 = vmul.f32 %v313, %v888
  %v897 = vmul.f32 %v326, %v889
  %v899 = vperm.slane %v881, 0
  %v900 = vperm.slane %v881, 1
  %v901 = vperm.slane %v881, 2
  %v902 = vperm.slane %v881, 3
  %v903 = vperm.slane %v881, 4
  %v904 = vperm.slane %v881, 5
  %v905 = vperm.slane %v881, 6
  %v906 = vperm.slane %v881, 7
  %v915 = vadd.f32 %v890, %v899
  %v916 = vadd.f32 %v891, %v900
  %v917 = vadd.f32 %v892, %v901
  %v918 = vadd.f32 %v893, %v902
  %v919 = vadd.f32 %v894, %v903
  %v920 = vadd.f32 %v895, %v904
  %v921 = vadd.f32 %v896, %v905
  %v922 = vadd.f32 %v897, %v906
  %v923 = vmax.f32 %v915, 0.0
  %v924 = vmax.f32 %v916, 0.0
  %v925 = vmax.f32 %v917, 0.0
  %v926 = vmax.f32 %v918, 0.0
  %v927 = vmax.f32 %v919, 0.0
  %v928 = vmax.f32 %v920, 0.0
  %v929 = vmax.f32 %v921, 0.0
  %v930 = vmax.f32 %v922, 0.0
  %v931 = vmul.f32 %v339, %v882
  %v932 = vmul.f32 %v352, %v883
  %v933 = vmul.f32 %v365, %v884
  %v934 = vmul.f32 %v378, %v885
  %v935 = vmul.f32 %v391, %v886
  %v936 = vmul.f32 %v404, %v887
  %v937 = vmul.f32 %v417, %v888
  %v938 = vmul.f32 %v430, %v889
  %v939 = vadd.f32 %v931, %v899
  %v940 = vadd.f32 %v932, %v900
  %v941 = vadd.f32 %v933, %v901
  %v942 = vadd.f32 %v934, %v902
  %v943 = vadd.f32 %v935, %v903
  %v944 = vadd.f32 %v936, %v904
  %v945 = vadd.f32 %v937, %v905
  %v946 = vadd.f32 %v938, %v906
  %v947 = vmax.f32 %v939, 0.0
  %v948 = vmax.f32 %v940, 0.0
  %v949 = vmax.f32 %v941, 0.0
  %v950 = vmax.f32 %v942, 0.0
  %v951 = vmax.f32 %v943, 0.0
  %v952 = vmax.f32 %v944, 0.0
  %v953 = vmax.f32 %v945, 0.0
  %v954 = vmax.f32 %v946, 0.0
  %v963 = vrot.slane %v947, 4
  %v964 = vrot.slane %v948, 4
  %v965 = vrot.slane %v949, 4
  %v966 = vrot.slane %v950, 4
  %v967 = vrot.slane %v951, 4
  %v968 = vrot.slane %v952, 4
  %v969 = vrot.slane %v953, 4
  %v970 = vrot.slane %v954, 4
  %v979 = vsel %vm433, %v923, %v963
  %v980 = vsel %vm433, %v924, %v964
  %v981 = vsel %vm433, %v925, %v965
  %v982 = vsel %vm433, %v926, %v966
  %v983 = vsel %vm433, %v927, %v967
  %v984 = vsel %vm433, %v928, %v968
  %v985 = vsel %vm433, %v929, %v969
  %v986 = vsel %vm433, %v930, %v970
  %v987 = vpack.c.bf16 %v979, %v979
  %v988 = vpack.c.bf16 %v980, %v980
  %v989 = vpack.c.bf16 %v981, %v981
  %v990 = vpack.c.bf16 %v982, %v982
  %v991 = vpack.c.bf16 %v983, %v983
  %v992 = vpack.c.bf16 %v984, %v984
  %v993 = vpack.c.bf16 %v985, %v985
  %v994 = vpack.c.bf16 %v986, %v986
  %v995 = vld [vmem:[%s4] sm:$0xf]
  %v996 = vld [vmem:[%s4 + $0x4] sm:$0xf]
  %v997 = vld [vmem:[%s4 + $0x8] sm:$0xf]
  %v998 = vld [vmem:[%s4 + $0xc] sm:$0xf]
  %v999 = vld [vmem:[%s4 + $0x10] sm:$0xf]
  %v1000 = vld [vmem:[%s4 + $0x14] sm:$0xf]
  %v1001 = vld [vmem:[%s4 + $0x18] sm:$0xf]
  %v1002 = vld [vmem:[%s4 + $0x1c] sm:$0xf]
  %v1003 = vld [vmem:[%s4 + $0x20] sm:$0xf]
  %v1004 = vld [vmem:[%s4 + $0x24] sm:$0xf]
  %v1005 = vld [vmem:[%s4 + $0x28] sm:$0xf]
  %v1006 = vld [vmem:[%s4 + $0x2c] sm:$0xf]
  %v1007 = vld [vmem:[%s4 + $0x30] sm:$0xf]
  %v1008 = vld [vmem:[%s4 + $0x34] sm:$0xf]
  %v1009 = vld [vmem:[%s4 + $0x38] sm:$0xf]
  %v1010 = vld [vmem:[%s4 + $0x3c] sm:$0xf]
  %v1011 = vld [vmem:[%s4 + $0x40] sm:$0xf]
  %v1012 = vld [vmem:[%s4 + $0x44] sm:$0xf]
  %v1013 = vld [vmem:[%s4 + $0x48] sm:$0xf]
  %v1014 = vld [vmem:[%s4 + $0x4c] sm:$0xf]
  %v1015 = vld [vmem:[%s4 + $0x50] sm:$0xf]
  %v1016 = vld [vmem:[%s4 + $0x54] sm:$0xf]
  %v1017 = vld [vmem:[%s4 + $0x58] sm:$0xf]
  %v1018 = vld [vmem:[%s4 + $0x5c] sm:$0xf]
  %v1019 = vld [vmem:[%s4 + $0x60] sm:$0xf]
  %v1020 = vld [vmem:[%s4 + $0x64] sm:$0xf]
  %v1021 = vld [vmem:[%s4 + $0x68] sm:$0xf]
  %v1022 = vld [vmem:[%s4 + $0x6c] sm:$0xf]
  %v1023 = vld [vmem:[%s4 + $0x70] sm:$0xf]
  %v1024 = vld [vmem:[%s4 + $0x74] sm:$0xf]
  %v1025 = vld [vmem:[%s4 + $0x78] sm:$0xf]
  %v1026 = vld [vmem:[%s4 + $0x7c] sm:$0xf]
  %v1027 = vld [vmem:[%s4 + $0x80] sm:$0xf]
  %v1028 = vld [vmem:[%s4 + $0x84] sm:$0xf]
  %v1029 = vld [vmem:[%s4 + $0x88] sm:$0xf]
  %v1030 = vld [vmem:[%s4 + $0x8c] sm:$0xf]
  %v1031 = vld [vmem:[%s4 + $0x90] sm:$0xf]
  %v1032 = vld [vmem:[%s4 + $0x94] sm:$0xf]
  %v1033 = vld [vmem:[%s4 + $0x98] sm:$0xf]
  %v1034 = vld [vmem:[%s4 + $0x9c] sm:$0xf]
  %v1035 = vld [vmem:[%s4 + $0xa0] sm:$0xf]
  %v1036 = vld [vmem:[%s4 + $0xa4] sm:$0xf]
  %v1037 = vld [vmem:[%s4 + $0xa8] sm:$0xf]
  %v1038 = vld [vmem:[%s4 + $0xac] sm:$0xf]
  %v1039 = vld [vmem:[%s4 + $0xb0] sm:$0xf]
  %v1040 = vld [vmem:[%s4 + $0xb4] sm:$0xf]
  %v1041 = vld [vmem:[%s4 + $0xb8] sm:$0xf]
  %v1042 = vld [vmem:[%s4 + $0xbc] sm:$0xf]
  %v1043 = vld [vmem:[%s4 + $0xc0] sm:$0xf]
  %v1044 = vld [vmem:[%s4 + $0xc4] sm:$0xf]
  %v1045 = vld [vmem:[%s4 + $0xc8] sm:$0xf]
  %v1046 = vld [vmem:[%s4 + $0xcc] sm:$0xf]
  %v1047 = vld [vmem:[%s4 + $0xd0] sm:$0xf]
  %v1048 = vld [vmem:[%s4 + $0xd4] sm:$0xf]
  %v1049 = vld [vmem:[%s4 + $0xd8] sm:$0xf]
  %v1050 = vld [vmem:[%s4 + $0xdc] sm:$0xf]
  %v1051 = vld [vmem:[%s4 + $0xe0] sm:$0xf]
  %v1052 = vld [vmem:[%s4 + $0xe4] sm:$0xf]
  %v1053 = vld [vmem:[%s4 + $0xe8] sm:$0xf]
  %v1054 = vld [vmem:[%s4 + $0xec] sm:$0xf]
  %v1055 = vld [vmem:[%s4 + $0xf0] sm:$0xf]
  %v1056 = vld [vmem:[%s4 + $0xf4] sm:$0xf]
  %v1057 = vld [vmem:[%s4 + $0xf8] sm:$0xf]
  %v1058 = vld [vmem:[%s4 + $0xfc] sm:$0xf]
  %v1059 = vld [vmem:[%s4 + $0x100] sm:$0xf]
  %v1060 = vld [vmem:[%s4 + $0x104] sm:$0xf]
  %v1061 = vld [vmem:[%s4 + $0x108] sm:$0xf]
  %v1062 = vld [vmem:[%s4 + $0x10c] sm:$0xf]
  %v1063 = vld [vmem:[%s4 + $0x110] sm:$0xf]
  %v1064 = vld [vmem:[%s4 + $0x114] sm:$0xf]
  %v1065 = vld [vmem:[%s4 + $0x118] sm:$0xf]
  %v1066 = vld [vmem:[%s4 + $0x11c] sm:$0xf]
  %v1067 = vld [vmem:[%s4 + $0x120] sm:$0xf]
  %v1068 = vld [vmem:[%s4 + $0x124] sm:$0xf]
  %v1069 = vld [vmem:[%s4 + $0x128] sm:$0xf]
  %v1070 = vld [vmem:[%s4 + $0x12c] sm:$0xf]
  %v1071 = vld [vmem:[%s4 + $0x130] sm:$0xf]
  %v1072 = vld [vmem:[%s4 + $0x134] sm:$0xf]
  %v1073 = vld [vmem:[%s4 + $0x138] sm:$0xf]
  %v1074 = vld [vmem:[%s4 + $0x13c] sm:$0xf]
  %v1075 = vld [vmem:[%s4 + $0x140] sm:$0xf]
  %v1076 = vld [vmem:[%s4 + $0x144] sm:$0xf]
  %v1077 = vld [vmem:[%s4 + $0x148] sm:$0xf]
  %v1078 = vld [vmem:[%s4 + $0x14c] sm:$0xf]
  %v1079 = vld [vmem:[%s4 + $0x150] sm:$0xf]
  %v1080 = vld [vmem:[%s4 + $0x154] sm:$0xf]
  %v1081 = vld [vmem:[%s4 + $0x158] sm:$0xf]
  %v1082 = vld [vmem:[%s4 + $0x15c] sm:$0xf]
  %v1083 = vld [vmem:[%s4 + $0x160] sm:$0xf]
  %v1084 = vld [vmem:[%s4 + $0x164] sm:$0xf]
  %v1085 = vld [vmem:[%s4 + $0x168] sm:$0xf]
  %v1086 = vld [vmem:[%s4 + $0x16c] sm:$0xf]
  %v1087 = vld [vmem:[%s4 + $0x170] sm:$0xf]
  %v1088 = vld [vmem:[%s4 + $0x174] sm:$0xf]
  %v1089 = vld [vmem:[%s4 + $0x178] sm:$0xf]
  %v1090 = vld [vmem:[%s4 + $0x17c] sm:$0xf]
  %v1091 = vld [vmem:[%s4 + $0x180] sm:$0xf]
  %v1092 = vld [vmem:[%s4 + $0x184] sm:$0xf]
  %v1093 = vld [vmem:[%s4 + $0x188] sm:$0xf]
  %v1094 = vld [vmem:[%s4 + $0x18c] sm:$0xf]
  %v1095 = vld [vmem:[%s4 + $0x190] sm:$0xf]
  %v1096 = vld [vmem:[%s4 + $0x194] sm:$0xf]
  %v1097 = vld [vmem:[%s4 + $0x198] sm:$0xf]
  %v1098 = vld [vmem:[%s4 + $0x19c] sm:$0xf]
  %v1099 = vld [vmem:[%s4 + $0x1a0] sm:$0xf]
  %v1100 = vld [vmem:[%s4 + $0x1a4] sm:$0xf]
  %v1101 = vld [vmem:[%s4 + $0x1a8] sm:$0xf]
  %v1102 = vld [vmem:[%s4 + $0x1ac] sm:$0xf]
  %v1103 = vld [vmem:[%s4 + $0x1b0] sm:$0xf]
  %v1104 = vld [vmem:[%s4 + $0x1b4] sm:$0xf]
  %v1105 = vld [vmem:[%s4 + $0x1b8] sm:$0xf]
  %v1106 = vld [vmem:[%s4 + $0x1bc] sm:$0xf]
  %v1107 = vld [vmem:[%s4 + $0x1c0] sm:$0xf]
  %v1108 = vld [vmem:[%s4 + $0x1c4] sm:$0xf]
  %v1109 = vld [vmem:[%s4 + $0x1c8] sm:$0xf]
  %v1110 = vld [vmem:[%s4 + $0x1cc] sm:$0xf]
  %v1111 = vld [vmem:[%s4 + $0x1d0] sm:$0xf]
  %v1112 = vld [vmem:[%s4 + $0x1d4] sm:$0xf]
  %v1113 = vld [vmem:[%s4 + $0x1d8] sm:$0xf]
  %v1114 = vld [vmem:[%s4 + $0x1dc] sm:$0xf]
  %v1115 = vld [vmem:[%s4 + $0x1e0] sm:$0xf]
  %v1116 = vld [vmem:[%s4 + $0x1e4] sm:$0xf]
  %v1117 = vld [vmem:[%s4 + $0x1e8] sm:$0xf]
  %v1118 = vld [vmem:[%s4 + $0x1ec] sm:$0xf]
  %v1119 = vld [vmem:[%s4 + $0x1f0] sm:$0xf]
  %v1120 = vld [vmem:[%s4 + $0x1f4] sm:$0xf]
  %v1121 = vld [vmem:[%s4 + $0x1f8] sm:$0xf]
  %v1122 = vld [vmem:[%s4 + $0x1fc] sm:$0xf]
  %v1251 = vunpack.c.l.b16 %v995
  %v1252 = vunpack.c.l.b16 %v996
  %v1253 = vunpack.c.l.b16 %v997
  %v1254 = vunpack.c.l.b16 %v998
  %v1255 = vunpack.c.l.b16 %v999
  %v1256 = vunpack.c.l.b16 %v1000
  %v1257 = vunpack.c.l.b16 %v1001
  %v1258 = vunpack.c.l.b16 %v1002
  %v1259 = vunpack.c.l.b16 %v1003
  %v1260 = vunpack.c.l.b16 %v1004
  %v1261 = vunpack.c.l.b16 %v1005
  %v1262 = vunpack.c.l.b16 %v1006
  %v1263 = vunpack.c.l.b16 %v1007
  %v1264 = vunpack.c.l.b16 %v1008
  %v1265 = vunpack.c.l.b16 %v1009
  %v1266 = vunpack.c.l.b16 %v1010
  %v1267 = vunpack.c.l.b16 %v1011
  %v1268 = vunpack.c.l.b16 %v1012
  %v1269 = vunpack.c.l.b16 %v1013
  %v1270 = vunpack.c.l.b16 %v1014
  %v1271 = vunpack.c.l.b16 %v1015
  %v1272 = vunpack.c.l.b16 %v1016
  %v1273 = vunpack.c.l.b16 %v1017
  %v1274 = vunpack.c.l.b16 %v1018
  %v1275 = vunpack.c.l.b16 %v1019
  %v1276 = vunpack.c.l.b16 %v1020
  %v1277 = vunpack.c.l.b16 %v1021
  %v1278 = vunpack.c.l.b16 %v1022
  %v1279 = vunpack.c.l.b16 %v1023
  %v1280 = vunpack.c.l.b16 %v1024
  %v1281 = vunpack.c.l.b16 %v1025
  %v1282 = vunpack.c.l.b16 %v1026
  %v1283 = vunpack.c.l.b16 %v1027
  %v1284 = vunpack.c.l.b16 %v1028
  %v1285 = vunpack.c.l.b16 %v1029
  %v1286 = vunpack.c.l.b16 %v1030
  %v1287 = vunpack.c.l.b16 %v1031
  %v1288 = vunpack.c.l.b16 %v1032
  %v1289 = vunpack.c.l.b16 %v1033
  %v1290 = vunpack.c.l.b16 %v1034
  %v1291 = vunpack.c.l.b16 %v1035
  %v1292 = vunpack.c.l.b16 %v1036
  %v1293 = vunpack.c.l.b16 %v1037
  %v1294 = vunpack.c.l.b16 %v1038
  %v1295 = vunpack.c.l.b16 %v1039
  %v1296 = vunpack.c.l.b16 %v1040
  %v1297 = vunpack.c.l.b16 %v1041
  %v1298 = vunpack.c.l.b16 %v1042
  %v1299 = vunpack.c.l.b16 %v1043
  %v1300 = vunpack.c.l.b16 %v1044
  %v1301 = vunpack.c.l.b16 %v1045
  %v1302 = vunpack.c.l.b16 %v1046
  %v1303 = vunpack.c.l.b16 %v1047
  %v1304 = vunpack.c.l.b16 %v1048
  %v1305 = vunpack.c.l.b16 %v1049
  %v1306 = vunpack.c.l.b16 %v1050
  %v1307 = vunpack.c.l.b16 %v1051
  %v1308 = vunpack.c.l.b16 %v1052
  %v1309 = vunpack.c.l.b16 %v1053
  %v1310 = vunpack.c.l.b16 %v1054
  %v1311 = vunpack.c.l.b16 %v1055
  %v1312 = vunpack.c.l.b16 %v1056
  %v1313 = vunpack.c.l.b16 %v1057
  %v1314 = vunpack.c.l.b16 %v1058
  %v1315 = vunpack.c.l.b16 %v1059
  %v1316 = vunpack.c.l.b16 %v1060
  %v1317 = vunpack.c.l.b16 %v1061
  %v1318 = vunpack.c.l.b16 %v1062
  %v1319 = vunpack.c.l.b16 %v1063
  %v1320 = vunpack.c.l.b16 %v1064
  %v1321 = vunpack.c.l.b16 %v1065
  %v1322 = vunpack.c.l.b16 %v1066
  %v1323 = vunpack.c.l.b16 %v1067
  %v1324 = vunpack.c.l.b16 %v1068
  %v1325 = vunpack.c.l.b16 %v1069
  %v1326 = vunpack.c.l.b16 %v1070
  %v1327 = vunpack.c.l.b16 %v1071
  %v1328 = vunpack.c.l.b16 %v1072
  %v1329 = vunpack.c.l.b16 %v1073
  %v1330 = vunpack.c.l.b16 %v1074
  %v1331 = vunpack.c.l.b16 %v1075
  %v1332 = vunpack.c.l.b16 %v1076
  %v1333 = vunpack.c.l.b16 %v1077
  %v1334 = vunpack.c.l.b16 %v1078
  %v1335 = vunpack.c.l.b16 %v1079
  %v1336 = vunpack.c.l.b16 %v1080
  %v1337 = vunpack.c.l.b16 %v1081
  %v1338 = vunpack.c.l.b16 %v1082
  %v1339 = vunpack.c.l.b16 %v1083
  %v1340 = vunpack.c.l.b16 %v1084
  %v1341 = vunpack.c.l.b16 %v1085
  %v1342 = vunpack.c.l.b16 %v1086
  %v1343 = vunpack.c.l.b16 %v1087
  %v1344 = vunpack.c.l.b16 %v1088
  %v1345 = vunpack.c.l.b16 %v1089
  %v1346 = vunpack.c.l.b16 %v1090
  %v1347 = vunpack.c.l.b16 %v1091
  %v1348 = vunpack.c.l.b16 %v1092
  %v1349 = vunpack.c.l.b16 %v1093
  %v1350 = vunpack.c.l.b16 %v1094
  %v1351 = vunpack.c.l.b16 %v1095
  %v1352 = vunpack.c.l.b16 %v1096
  %v1353 = vunpack.c.l.b16 %v1097
  %v1354 = vunpack.c.l.b16 %v1098
  %v1355 = vunpack.c.l.b16 %v1099
  %v1356 = vunpack.c.l.b16 %v1100
  %v1357 = vunpack.c.l.b16 %v1101
  %v1358 = vunpack.c.l.b16 %v1102
  %v1359 = vunpack.c.l.b16 %v1103
  %v1360 = vunpack.c.l.b16 %v1104
  %v1361 = vunpack.c.l.b16 %v1105
  %v1362 = vunpack.c.l.b16 %v1106
  %v1363 = vunpack.c.l.b16 %v1107
  %v1364 = vunpack.c.l.b16 %v1108
  %v1365 = vunpack.c.l.b16 %v1109
  %v1366 = vunpack.c.l.b16 %v1110
  %v1367 = vunpack.c.l.b16 %v1111
  %v1368 = vunpack.c.l.b16 %v1112
  %v1369 = vunpack.c.l.b16 %v1113
  %v1370 = vunpack.c.l.b16 %v1114
  %v1371 = vunpack.c.l.b16 %v1115
  %v1372 = vunpack.c.l.b16 %v1116
  %v1373 = vunpack.c.l.b16 %v1117
  %v1374 = vunpack.c.l.b16 %v1118
  %v1375 = vunpack.c.l.b16 %v1119
  %v1376 = vunpack.c.l.b16 %v1120
  %v1377 = vunpack.c.l.b16 %v1121
  %v1378 = vunpack.c.l.b16 %v1122
  %v1379 = vpack.c.b16 %v1252, %v1251
  %v1380 = vpack.c.b16 %v1254, %v1253
  %v1381 = vpack.c.b16 %v1256, %v1255
  %v1382 = vpack.c.b16 %v1258, %v1257
  %v1383 = vpack.c.b16 %v1260, %v1259
  %v1384 = vpack.c.b16 %v1262, %v1261
  %v1385 = vpack.c.b16 %v1264, %v1263
  %v1386 = vpack.c.b16 %v1266, %v1265
  %v1387 = vpack.c.b16 %v1268, %v1267
  %v1388 = vpack.c.b16 %v1270, %v1269
  %v1389 = vpack.c.b16 %v1272, %v1271
  %v1390 = vpack.c.b16 %v1274, %v1273
  %v1391 = vpack.c.b16 %v1276, %v1275
  %v1392 = vpack.c.b16 %v1278, %v1277
  %v1393 = vpack.c.b16 %v1280, %v1279
  %v1394 = vpack.c.b16 %v1282, %v1281
  %v1395 = vpack.c.b16 %v1284, %v1283
  %v1396 = vpack.c.b16 %v1286, %v1285
  %v1397 = vpack.c.b16 %v1288, %v1287
  %v1398 = vpack.c.b16 %v1290, %v1289
  %v1399 = vpack.c.b16 %v1292, %v1291
  %v1400 = vpack.c.b16 %v1294, %v1293
  %v1401 = vpack.c.b16 %v1296, %v1295
  %v1402 = vpack.c.b16 %v1298, %v1297
  %v1403 = vpack.c.b16 %v1300, %v1299
  %v1404 = vpack.c.b16 %v1302, %v1301
  %v1405 = vpack.c.b16 %v1304, %v1303
  %v1406 = vpack.c.b16 %v1306, %v1305
  %v1407 = vpack.c.b16 %v1308, %v1307
  %v1408 = vpack.c.b16 %v1310, %v1309
  %v1409 = vpack.c.b16 %v1312, %v1311
  %v1410 = vpack.c.b16 %v1314, %v1313
  %v1411 = vpack.c.b16 %v1316, %v1315
  %v1412 = vpack.c.b16 %v1318, %v1317
  %v1413 = vpack.c.b16 %v1320, %v1319
  %v1414 = vpack.c.b16 %v1322, %v1321
  %v1415 = vpack.c.b16 %v1324, %v1323
  %v1416 = vpack.c.b16 %v1326, %v1325
  %v1417 = vpack.c.b16 %v1328, %v1327
  %v1418 = vpack.c.b16 %v1330, %v1329
  %v1419 = vpack.c.b16 %v1332, %v1331
  %v1420 = vpack.c.b16 %v1334, %v1333
  %v1421 = vpack.c.b16 %v1336, %v1335
  %v1422 = vpack.c.b16 %v1338, %v1337
  %v1423 = vpack.c.b16 %v1340, %v1339
  %v1424 = vpack.c.b16 %v1342, %v1341
  %v1425 = vpack.c.b16 %v1344, %v1343
  %v1426 = vpack.c.b16 %v1346, %v1345
  %v1427 = vpack.c.b16 %v1348, %v1347
  %v1428 = vpack.c.b16 %v1350, %v1349
  %v1429 = vpack.c.b16 %v1352, %v1351
  %v1430 = vpack.c.b16 %v1354, %v1353
  %v1431 = vpack.c.b16 %v1356, %v1355
  %v1432 = vpack.c.b16 %v1358, %v1357
  %v1433 = vpack.c.b16 %v1360, %v1359
  %v1434 = vpack.c.b16 %v1362, %v1361
  %v1435 = vpack.c.b16 %v1364, %v1363
  %v1436 = vpack.c.b16 %v1366, %v1365
  %v1437 = vpack.c.b16 %v1368, %v1367
  %v1438 = vpack.c.b16 %v1370, %v1369
  %v1439 = vpack.c.b16 %v1372, %v1371
  %v1440 = vpack.c.b16 %v1374, %v1373
  %v1441 = vpack.c.b16 %v1376, %v1375
  %v1442 = vpack.c.b16 %v1378, %v1377
  %1507 = vmatpush.bf16.msra.mxu0 %v1386
  %1508 = vmatpush.bf16.msra.mxu0 %v1385
  %1509 = vmatpush.bf16.msra.mxu0 %v1384
  %1510 = vmatpush.bf16.msra.mxu0 %v1383
  %1511 = vmatpush.bf16.msra.mxu0 %v1382
  %1512 = vmatpush.bf16.msra.mxu0 %v1381
  %1513 = vmatpush.bf16.msra.mxu0 %v1380
  %1514 = vmatpush.bf16.msra.mxu0 %v1379
  %1515 = vmatmul.bf16.gmra.mxu0 %v987
  %v1516 = vpop.f32.mrf.mxu0
  %v1517 = vadd.f32 0.0, %v1516
  %v1518 = vpop.f32.mrf.mxu0
  %1519 = vdwg.mxu0
  %1520 = vmatpush.bf16.msra.mxu0 %v1394
  %1521 = vmatpush.bf16.msra.mxu0 %v1393
  %1522 = vmatpush.bf16.msra.mxu0 %v1392
  %1523 = vmatpush.bf16.msra.mxu0 %v1391
  %1524 = vmatpush.bf16.msra.mxu0 %v1390
  %1525 = vmatpush.bf16.msra.mxu0 %v1389
  %1526 = vmatpush.bf16.msra.mxu0 %v1388
  %1527 = vmatpush.bf16.msra.mxu0 %v1387
  %1528 = vmatmul.bf16.gmra.mxu0 %v988
  %v1529 = vpop.f32.mrf.mxu0
  %v1530 = vadd.f32 %v1517, %v1529
  %v1531 = vpop.f32.mrf.mxu0
  %1532 = vdwg.mxu0
  %1533 = vmatpush.bf16.msra.mxu0 %v1402
  %1534 = vmatpush.bf16.msra.mxu0 %v1401
  %1535 = vmatpush.bf16.msra.mxu0 %v1400
  %1536 = vmatpush.bf16.msra.mxu0 %v1399
  %1537 = vmatpush.bf16.msra.mxu0 %v1398
  %1538 = vmatpush.bf16.msra.mxu0 %v1397
  %1539 = vmatpush.bf16.msra.mxu0 %v1396
  %1540 = vmatpush.bf16.msra.mxu0 %v1395
  %1541 = vmatmul.bf16.gmra.mxu0 %v989
  %v1542 = vpop.f32.mrf.mxu0
  %v1543 = vadd.f32 %v1530, %v1542
  %v1544 = vpop.f32.mrf.mxu0
  %1545 = vdwg.mxu0
  %1546 = vmatpush.bf16.msra.mxu0 %v1410
  %1547 = vmatpush.bf16.msra.mxu0 %v1409
  %1548 = vmatpush.bf16.msra.mxu0 %v1408
  %1549 = vmatpush.bf16.msra.mxu0 %v1407
  %1550 = vmatpush.bf16.msra.mxu0 %v1406
  %1551 = vmatpush.bf16.msra.mxu0 %v1405
  %1552 = vmatpush.bf16.msra.mxu0 %v1404
  %1553 = vmatpush.bf16.msra.mxu0 %v1403
  %1554 = vmatmul.bf16.gmra.mxu0 %v990
  %v1555 = vpop.f32.mrf.mxu0
  %v1556 = vadd.f32 %v1543, %v1555
  %v1557 = vpop.f32.mrf.mxu0
  %1558 = vdwg.mxu0
  %1559 = vmatpush.bf16.msra.mxu0 %v1418
  %1560 = vmatpush.bf16.msra.mxu0 %v1417
  %1561 = vmatpush.bf16.msra.mxu0 %v1416
  %1562 = vmatpush.bf16.msra.mxu0 %v1415
  %1563 = vmatpush.bf16.msra.mxu0 %v1414
  %1564 = vmatpush.bf16.msra.mxu0 %v1413
  %1565 = vmatpush.bf16.msra.mxu0 %v1412
  %1566 = vmatpush.bf16.msra.mxu0 %v1411
  %1567 = vmatmul.bf16.gmra.mxu0 %v991
  %v1568 = vpop.f32.mrf.mxu0
  %v1569 = vadd.f32 %v1556, %v1568
  %v1570 = vpop.f32.mrf.mxu0
  %1571 = vdwg.mxu0
  %1572 = vmatpush.bf16.msra.mxu0 %v1426
  %1573 = vmatpush.bf16.msra.mxu0 %v1425
  %1574 = vmatpush.bf16.msra.mxu0 %v1424
  %1575 = vmatpush.bf16.msra.mxu0 %v1423
  %1576 = vmatpush.bf16.msra.mxu0 %v1422
  %1577 = vmatpush.bf16.msra.mxu0 %v1421
  %1578 = vmatpush.bf16.msra.mxu0 %v1420
  %1579 = vmatpush.bf16.msra.mxu0 %v1419
  %1580 = vmatmul.bf16.gmra.mxu0 %v992
  %v1581 = vpop.f32.mrf.mxu0
  %v1582 = vadd.f32 %v1569, %v1581
  %v1583 = vpop.f32.mrf.mxu0
  %1584 = vdwg.mxu0
  %1585 = vmatpush.bf16.msra.mxu0 %v1434
  %1586 = vmatpush.bf16.msra.mxu0 %v1433
  %1587 = vmatpush.bf16.msra.mxu0 %v1432
  %1588 = vmatpush.bf16.msra.mxu0 %v1431
  %1589 = vmatpush.bf16.msra.mxu0 %v1430
  %1590 = vmatpush.bf16.msra.mxu0 %v1429
  %1591 = vmatpush.bf16.msra.mxu0 %v1428
  %1592 = vmatpush.bf16.msra.mxu0 %v1427
  %1593 = vmatmul.bf16.gmra.mxu0 %v993
  %v1594 = vpop.f32.mrf.mxu0
  %v1595 = vadd.f32 %v1582, %v1594
  %v1596 = vpop.f32.mrf.mxu0
  %1597 = vdwg.mxu0
  %1598 = vmatpush.bf16.msra.mxu0 %v1442
  %1599 = vmatpush.bf16.msra.mxu0 %v1441
  %1600 = vmatpush.bf16.msra.mxu0 %v1440
  %1601 = vmatpush.bf16.msra.mxu0 %v1439
  %1602 = vmatpush.bf16.msra.mxu0 %v1438
  %1603 = vmatpush.bf16.msra.mxu0 %v1437
  %1604 = vmatpush.bf16.msra.mxu0 %v1436
  %1605 = vmatpush.bf16.msra.mxu0 %v1435
  %1606 = vmatmul.bf16.gmra.mxu0 %v994
  %v1607 = vpop.f32.mrf.mxu0
  %v1608 = vadd.f32 %v1595, %v1607
  %v1609 = vpop.f32.mrf.mxu0
  %1610 = vdwg.mxu0
  %v1611 = vsel %vm221, %v1608, 0.0
  %v1612 = vrot.slane %v1611, 4
  %v1613 = vadd.f32 %v1611, %v1612
  %v1614 = vrot.slane %v1613, 2
  %v1615 = vadd.f32 %v1613, %v1614
  %v1616 = vrot.slane %v1615, 1
  %v1617 = vadd.f32 %v1615, %v1616
  %v1618 = vmul.f32 %v1617, %v688
  %v1619 = vmul.f32 %v1608, %v1608
  %v1620 = vsel %vm221, %v1619, 0.0
  %v1621 = vrot.slane %v1620, 4
  %v1622 = vadd.f32 %v1620, %v1621
  %v1623 = vrot.slane %v1622, 2
  %v1624 = vadd.f32 %v1622, %v1623
  %v1625 = vrot.slane %v1624, 1
  %v1626 = vadd.f32 %v1624, %v1625
  %v1627 = vmul.f32 %v1626, %v688
  %v1628 = vmul.f32 %v1618, %v1618
  %v1629 = vsub.f32 %v1627, %v1628
  %v1630 = vadd.f32 %v1629, 1e-05
  %v1631 = vrsqrt.pop %v1630
  %v1632 = vmul.f32 %v1631, %v1630
  %v1633 = vmul.f32 %v1632, %v1631
  %v1634 = vmul.f32 0.5, %v1633
  %v1635 = vsub.f32 1.5, %v1634
  %v1636 = vmul.f32 %v1631, %v1635
  %vm1637 = vweird.f32 %v1630
  %vm1638 = vweird.f32 %v1631
  %vm1639 = vmor %vm1637, %vm1638
  %v1640 = vsel %vm1639, %v1631, %v1636
  %v1641 = vld [vmem:[%s5] sm:$0x1]
  %v1642 = vmul.f32 %v1640, %v1641
  %v1643 = vld [vmem:[%s6] sm:$0x1]
  %v1644 = vmul.f32 %v1618, %v1642
  %v1645 = vsub.f32 %v1643, %v1644
  %v1646 = vperm.slane %v1642, 0
  %v1647 = vmul.f32 %v1608, %v1646
  %v1649 = vperm.slane %v1645, 0
  %v1651 = vadd.f32 %v1647, %v1649
  %v1652 = vmax.f32 %v1651, 0.0
  %1653 = vst.msk [vmem:[%s7] sm:$0xff] %vm221, %v1652
  // Predicated region
  $region30: #{temporal_network.1} parent=0 // pred_check
    _
  $region31: #{temporal_network.1} parent=0 // pred_check_branch
    %1655 = sbr.rel (0) target = $region33
  $region32: #{temporal_network.1} parent=0 // pred_region
    _
  $region33: #{temporal_network.1} parent=0 // pred_fallthru
    _
  // Predicated region
  $region34: #{temporal_network.1} parent=0 // pred_check
    _
  $region35: #{temporal_network.1} parent=0 // pred_check_branch
    %1657 = sbr.rel (0) target = $region37
  $region36: #{temporal_network.1} parent=0 // pred_region
    _
  $region37: #{temporal_network.1} parent=0 // pred_fallthru
    _

</llo_original>
